<compile_context>
chip_gen: v6e
topology: v6e:2x2x1
jax: 0.10.0
libtpu: 0.0.40
codegen_flags: <defaults>
</compile_context>

<pallas_src>
import functools

import jax
import jax.numpy as jnp
from jax.experimental import pallas as pl
from jax.experimental.pallas import tpu as pltpu

GAMMA = 0.2
THRESH_DECAY = 0.7
_LANES = 128


def _aalif_kernel(dv_ref, spike_ref, v_ref, vth_ref, *,
                  inv_tau, v_prev, v_reset, v_th_prev, inv_batch):
    # dv_ref: (B, TS, 128) in its native dtype; upcast in-kernel.
    dv = dv_ref[...].astype(jnp.float32)

    v = v_prev + (dv - (v_prev - v_reset)) * inv_tau          # membrane update
    fired = (v - v_th_prev) > 0.0                             # heaviside fwd
    spike = fired.astype(jnp.float32)
    v_new = jnp.where(fired, jnp.float32(v_reset), v)         # reset if spiked

    spike_ref[...] = spike.astype(spike_ref.dtype)
    v_ref[...] = v_new.astype(v_ref.dtype)

    # v_th_prev is a scalar, so
    #   mean(GAMMA*spike + v_th_prev*decay, axis=0)
    #     == GAMMA*mean(spike, axis=0) + v_th_prev*decay.
    # Batch is the leading (non-tiled) axis -> reduce is just VPU adds.
    vth_ref[...] = ((GAMMA * inv_batch) * jnp.sum(spike, axis=0, keepdims=True)
                    + jnp.float32(v_th_prev * THRESH_DECAY))


def aalif_forward(dv_nchw, *, tau=1.0, v_threshold=1.0, v_reset=0.0,
                  alpha=1.0, v_prev=0.0, v_th_prev=None,
                  block_sublanes=256, spike_dtype=None, v_dtype=jnp.float32,
                  vmem_budget_bytes=8 * 1024 * 1024):
    """One AALIF step (post-reset scalar state). Returns (spike, v_new, v_th_new)
    with spike/v_new shaped like dv_nchw and v_th_new shaped dv_nchw.shape[1:]."""
    # TODO(synk): recurrent multi-step state (per-element v and per-feature v_th
    # after step 1) is not carried here; this implements the scalar-state step
    # right after reset(), matching the module's fresh-state forward.
    if v_th_prev is None:
        v_th_prev = v_threshold
    del alpha  # alpha only shapes the surrogate *backward*; forward is heaviside.

    B = dv_nchw.shape[0]
    feat_shape = dv_nchw.shape[1:]
    N = 1
    for d in feat_shape:
        N *= d

    in_dtype = dv_nchw.dtype
    if spike_dtype is None:
        spike_dtype = in_dtype        # 0/1 is exact in any float dtype

    # ---- fold features onto (sublane rows, 128 lanes) ----
    M = pl.cdiv(N, _LANES)

    # Tile sizing against a double-buffered VMEM budget (v5e scoped default is
    # 16 MiB, v7x physical VMEM is 64 MiB -> stay well below both).
    def _isz(dt):
        return jnp.dtype(dt).itemsize

    bytes_per_row = _LANES * (B * (_isz(in_dtype) + _isz(spike_dtype)
                                   + _isz(v_dtype)) + 4)
    max_ts = max(8, vmem_budget_bytes // (2 * bytes_per_row))

    ts = min(block_sublanes, max_ts)
    if M >= 16:
        # Keep the grid at >= 2 steps so v7x megacore can shard it.
        ts = min(ts, max(8, (M // 2) // 8 * 8))
    if ts >= M:
        ts = M                       # single block covering the full row axis
        m_pad = M
    else:
        ts = max(8, (ts // 8) * 8)   # (8, 128) tiling constraint
        m_pad = pl.cdiv(M, ts) * ts

    n_pad = m_pad * _LANES
    dv = dv_nchw.reshape(B, N)
    if n_pad != N:
        dv = jnp.pad(dv, ((0, 0), (0, n_pad - N)))
    dv = dv.reshape(B, m_pad, _LANES)

    grid = (m_pad // ts,)

    kernel = functools.partial(
        _aalif_kernel,
        inv_tau=float(1.0 / tau),
        v_prev=float(v_prev),
        v_reset=float(v_reset),
        v_th_prev=float(v_th_prev),
        inv_batch=float(1.0 / B),
    )

    spike, v_new, v_th = pl.pallas_call(
        kernel,
        out_shape=(
            jax.ShapeDtypeStruct((B, m_pad, _LANES), spike_dtype),   # spike
            jax.ShapeDtypeStruct((B, m_pad, _LANES), v_dtype),       # new v
            jax.ShapeDtypeStruct((1, m_pad, _LANES), jnp.float32),   # new v_th
        ),
        grid_spec=pltpu.PrefetchScalarGridSpec(
            num_scalar_prefetch=0,
            grid=grid,
            in_specs=[
                pl.BlockSpec((B, ts, _LANES), lambda i: (0, i, 0)),  # dv
            ],
            out_specs=[
                pl.BlockSpec((B, ts, _LANES), lambda i: (0, i, 0)),  # spike
                pl.BlockSpec((B, ts, _LANES), lambda i: (0, i, 0)),  # v
                pl.BlockSpec((1, ts, _LANES), lambda i: (0, i, 0)),  # v_th
            ],
        ),
        compiler_params=pltpu.CompilerParams(
            dimension_semantics=("parallel",)),
    )(dv)

    spike = spike.reshape(B, n_pad)[:, :N].reshape(dv_nchw.shape)
    v_new = v_new.reshape(B, n_pad)[:, :N].reshape(dv_nchw.shape)
    v_th = v_th.reshape(n_pad)[:N].reshape(feat_shape)
    return spike, v_new, v_th


def _aalif_reference(dv, *, tau, v_threshold, v_reset, v_prev, v_th_prev):
    dv = dv.astype(jnp.float32)
    v = v_prev + (dv - (v_prev - v_reset)) / tau
    spike = (v - v_th_prev > 0.0).astype(jnp.float32)
    v_new = (1.0 - spike) * v + spike * v_reset
    v_th = jnp.mean(GAMMA * spike + v_th_prev * THRESH_DECAY, axis=0)
    return spike, v_new, v_th


if __name__ == "__main__":
    key = jax.random.PRNGKey(0)
    B, C, H, W = 2, 4, 16, 16
    # deterministic example input (centered around threshold so spikes vary)
    dv = jax.random.normal(key, (B, C, H, W), dtype=jnp.float32) * 2.0 + 1.0

    tau, v_threshold, v_reset, alpha = 1.0, 1.0, 0.0, 1.0

    # f32 path
    spike, v_new, v_th = aalif_forward(
        dv, tau=tau, v_threshold=v_threshold, v_reset=v_reset, alpha=alpha)
    jax.block_until_ready((spike, v_new, v_th))

    ref_spike, ref_v, ref_vth = _aalif_reference(
        dv, tau=tau, v_threshold=v_threshold, v_reset=v_reset,
        v_prev=0.0, v_th_prev=v_threshold)
    assert jnp.allclose(spike, ref_spike), "spike mismatch (f32)"
    assert jnp.allclose(v_new, ref_v, atol=1e-6), "v mismatch (f32)"
    assert jnp.allclose(v_th, ref_vth, atol=1e-6), "v_th mismatch (f32)"

    # bf16 input path: native-dtype HBM read, in-kernel upcast, bf16 spike out
    dv_bf16 = dv.astype(jnp.bfloat16)
    spike_b, v_b, vth_b = aalif_forward(
        dv_bf16, tau=tau, v_threshold=v_threshold, v_reset=v_reset, alpha=alpha)
    jax.block_until_ready((spike_b, v_b, vth_b))

    ref_spike_b, ref_v_b, ref_vth_b = _aalif_reference(
        dv_bf16, tau=tau, v_threshold=v_threshold, v_reset=v_reset,
        v_prev=0.0, v_th_prev=v_threshold)
    assert spike_b.dtype == jnp.bfloat16
    assert jnp.allclose(spike_b.astype(jnp.float32), ref_spike_b), "spike mismatch (bf16)"
    assert jnp.allclose(v_b, ref_v_b, atol=1e-6), "v mismatch (bf16)"
    assert jnp.allclose(vth_b, ref_vth_b, atol=1e-6), "v_th mismatch (bf16)"

    # ragged feature size (not a multiple of 128) -> padding/slicing path
    dv_odd = jax.random.normal(jax.random.PRNGKey(1), (2, 3, 5, 7),
                               dtype=jnp.float32) * 2.0 + 1.0
    spike_o, v_o, vth_o = aalif_forward(
        dv_odd, tau=tau, v_threshold=v_threshold, v_reset=v_reset, alpha=alpha)
    jax.block_until_ready((spike_o, v_o, vth_o))
    ref_spike_o, ref_v_o, ref_vth_o = _aalif_reference(
        dv_odd, tau=tau, v_threshold=v_threshold, v_reset=v_reset,
        v_prev=0.0, v_th_prev=v_threshold)
    assert jnp.allclose(spike_o, ref_spike_o), "spike mismatch (ragged)"
    assert jnp.allclose(v_o, ref_v_o, atol=1e-6), "v mismatch (ragged)"
    assert jnp.allclose(vth_o, ref_vth_o, atol=1e-6), "v_th mismatch (ragged)"

    print("KERNEL_OK")
</pallas_src>

<mosaic_0001>
module attributes {stable_mosaic.version = 11 : i64} {
  func.func @_aalif_kernel(%arg0: i32, %arg1: memref<2x8x128xf32, #tpu.memory_space<vmem>>, %arg2: memref<2x8x128xf32, #tpu.memory_space<vmem>>, %arg3: memref<2x8x128xf32, #tpu.memory_space<vmem>>, %arg4: memref<1x8x128xf32, #tpu.memory_space<vmem>>) attributes {dimension_semantics = [#tpu.dimension_semantics<parallel>], iteration_bounds = array<i64: 1>, scalar_prefetch = 0 : i64, scratch_operands = 0 : i64, tpu.core_type = #tpu.core_type<tc>, window_params = [{transform_indices = @transform_0, window_bounds = array<i64: 2, 8, 128>}, {transform_indices = @transform_1, window_bounds = array<i64: 2, 8, 128>}, {transform_indices = @transform_2, window_bounds = array<i64: 2, 8, 128>}, {transform_indices = @transform_3, window_bounds = array<i64: 1, 8, 128>}]} {
    %c0 = arith.constant 0 : index
    %c0_0 = arith.constant 0 : index
    %c0_1 = arith.constant 0 : index
    %0 = vector.load %arg1[%c0, %c0_0, %c0_1] : memref<2x8x128xf32, #tpu.memory_space<vmem>>, vector<2x8x128xf32>
    %cst = arith.constant 0.000000e+00 : f32
    %1 = vector.broadcast %cst : f32 to vector<2x8x128xf32>
    %2 = arith.subf %0, %1 : vector<2x8x128xf32>
    %cst_2 = arith.constant 1.000000e+00 : f32
    %3 = vector.broadcast %cst_2 : f32 to vector<2x8x128xf32>
    %4 = arith.mulf %2, %3 : vector<2x8x128xf32>
    %cst_3 = arith.constant 0.000000e+00 : f32
    %5 = vector.broadcast %cst_3 : f32 to vector<2x8x128xf32>
    %6 = arith.addf %5, %4 : vector<2x8x128xf32>
    %cst_4 = arith.constant 1.000000e+00 : f32
    %7 = vector.broadcast %cst_4 : f32 to vector<2x8x128xf32>
    %8 = arith.subf %6, %7 : vector<2x8x128xf32>
    %cst_5 = arith.constant 0.000000e+00 : f32
    %9 = vector.broadcast %cst_5 : f32 to vector<2x8x128xf32>
    %10 = arith.cmpf ogt, %8, %9 : vector<2x8x128xf32>
    %11 = arith.extui %10 : vector<2x8x128xi1> to vector<2x8x128xi32>
    %12 = arith.sitofp %11 : vector<2x8x128xi32> to vector<2x8x128xf32>
    %cst_6 = arith.constant 0.000000e+00 : f32
    %13 = vector.broadcast %cst_6 : f32 to vector<2x8x128xf32>
    %14 = arith.select %10, %13, %6 : vector<2x8x128xi1>, vector<2x8x128xf32>
    %c0_7 = arith.constant 0 : index
    %c0_8 = arith.constant 0 : index
    %c0_9 = arith.constant 0 : index
    %15 = vector.load %arg2[%c0_7, %c0_8, %c0_9] : memref<2x8x128xf32, #tpu.memory_space<vmem>>, vector<2x8x128xf32>
    tpu.vector_store %arg2[%c0_7, %c0_8, %c0_9], %12 {strides = array<i32>} : memref<2x8x128xf32, #tpu.memory_space<vmem>>, vector<2x8x128xf32>,
    %c0_10 = arith.constant 0 : index
    %c0_11 = arith.constant 0 : index
    %c0_12 = arith.constant 0 : index
    %16 = vector.load %arg3[%c0_10, %c0_11, %c0_12] : memref<2x8x128xf32, #tpu.memory_space<vmem>>, vector<2x8x128xf32>
    tpu.vector_store %arg3[%c0_10, %c0_11, %c0_12], %14 {strides = array<i32>} : memref<2x8x128xf32, #tpu.memory_space<vmem>>, vector<2x8x128xf32>,
    %cst_13 = arith.constant dense<0.000000e+00> : vector<8x128xf32>
    %17 = vector.multi_reduction <add>, %12, %cst_13 [0] : vector<2x8x128xf32> to vector<8x128xf32>
    %18 = vector.shape_cast %17 : vector<8x128xf32> to vector<1x8x128xf32>
    %cst_14 = arith.constant 1.000000e-01 : f32
    %19 = vector.broadcast %cst_14 : f32 to vector<1x8x128xf32>
    %20 = arith.mulf %19, %18 : vector<1x8x128xf32>
    %cst_15 = arith.constant 0.699999988 : f32
    %21 = vector.broadcast %cst_15 : f32 to vector<1x8x128xf32>
    %22 = arith.addf %20, %21 : vector<1x8x128xf32>
    %c0_16 = arith.constant 0 : index
    %c0_17 = arith.constant 0 : index
    %c0_18 = arith.constant 0 : index
    %23 = vector.load %arg4[%c0_16, %c0_17, %c0_18] : memref<1x8x128xf32, #tpu.memory_space<vmem>>, vector<1x8x128xf32>
    tpu.vector_store %arg4[%c0_16, %c0_17, %c0_18], %22 {strides = array<i32>} : memref<1x8x128xf32, #tpu.memory_space<vmem>>, vector<1x8x128xf32>,
    return
  }
  func.func @transform_0(%arg0: i32) -> (i32, i32, i32) {
    %c0_i32 = arith.constant 0 : i32
    %c0_i32_0 = arith.constant 0 : i32
    %c0_i32_1 = arith.constant 0 : i32
    return %c0_i32, %arg0, %c0_i32_0 : i32, i32, i32
  }
  func.func @transform_1(%arg0: i32) -> (i32, i32, i32) {
    %c0_i32 = arith.constant 0 : i32
    %c0_i32_0 = arith.constant 0 : i32
    %c0_i32_1 = arith.constant 0 : i32
    return %c0_i32, %arg0, %c0_i32_0 : i32, i32, i32
  }
  func.func @transform_2(%arg0: i32) -> (i32, i32, i32) {
    %c0_i32 = arith.constant 0 : i32
    %c0_i32_0 = arith.constant 0 : i32
    %c0_i32_1 = arith.constant 0 : i32
    return %c0_i32, %arg0, %c0_i32_0 : i32, i32, i32
  }
  func.func @transform_3(%arg0: i32) -> (i32, i32, i32) {
    %c0_i32 = arith.constant 0 : i32
    %c0_i32_0 = arith.constant 0 : i32
    %c0_i32_1 = arith.constant 0 : i32
    return %c0_i32, %arg0, %c0_i32_0 : i32, i32, i32
  }
}

</mosaic_0001>

<llo_original>
// kernel: tpu_custom_call.1
$region0: #{tpu_custom_call.1}
  #allocation0 [shape = 'u32[]', space=smem, size = 0x4, offset = 0x4, fixed_abs, tag = 'smem constant byte address 0x4 - core index']
  #allocation1 [shape = 'u32[144,128]{1,0:T(1,128)}', space=vmem, size = 0x12000, scoped, tag = 'internal scratch']
  %s0 = inlined_call_operand.hbm [shape: f32[2,8,128], index: 0, kind: input, shape index: {}]
  %s1 = inlined_call_operand.hbm [shape: f32[2,8,128], index: 1, kind: output, shape index: {0}]
  %s2 = inlined_call_operand.hbm [shape: f32[2,8,128], index: 2, kind: output, shape index: {1}]
  %s3 = inlined_call_operand.hbm [shape: f32[1,8,128], index: 3, kind: output, shape index: {2}]
  %4 = xla_tuple %s1, %s2, %s3
  %s5 = sld [smem:[#allocation0]]
  $region34: #{tpu_custom_call.1} parent=0
    _
  %s7 = ssub.s32 1, %s5
  %s8 = scalar_select 0, %s7, %s5
  $region1: #{tpu_custom_call.1} parent=0
    #allocation2 [shape = 'u8[8192]{0}', space=vmem, size = 0x2000, scoped, tag = 'input window, operand 0, single buffered']
    #allocation3 [shape = 's32[1]{0}', space=sflag, size = 0x4, scoped, tag = 'scoped memory for tpu_custom_call.1']
    #allocation4 [shape = 's32[1]{0}', space=sflag, size = 0x4, scoped, tag = 'scoped memory for tpu_custom_call.1']
    #allocation5 [shape = 'u8[8192]{0}', space=vmem, size = 0x2000, scoped, tag = 'output window, operand 0, single buffered']
    #allocation6 [shape = 'u8[8192]{0}', space=vmem, size = 0x2000, scoped, tag = 'output window, operand 1, single buffered']
    #allocation7 [shape = 's32[1]{0}', space=sflag, size = 0x4, scoped, tag = 'scoped memory for tpu_custom_call.1']
    #allocation8 [shape = 'u8[4096]{0}', space=vmem, size = 0x1000, scoped, tag = 'output window, operand 2, single buffered']
    %9 = vsyncpa [#allocation3], 0
    %10 = vsyncpa [#allocation4], 0
    %11 = vsyncpa [#allocation7], 0
    // Predicated region
    $region2: #{tpu_custom_call.1} parent=1 // pred_check
      _
    $region3: #{tpu_custom_call.1} parent=1 // pred_check_branch
      %13 = sbr.rel (0) target = $region5
    $region4: #{tpu_custom_call.1} parent=1 // pred_region
      %s15 = ssub.s32 256, 256
      %16 = vsyncadd [#allocation3], %s15
      %s17 = sshll.u32 [#allocation2], 4
      %s18 = int_to_ptr.vmem [resolvable:$true] %s17
      %23 = dma.hbm_to_vmem [thread:$0]  %s0, 256, %s18, [#allocation3], 128, 128, 8
    $region5: #{tpu_custom_call.1} parent=1 // pred_fallthru
      _
    // Predicated region
    $region6: #{tpu_custom_call.1} parent=1 // pred_check
      _
    $region7: #{tpu_custom_call.1} parent=1 // pred_check_branch
      %25 = sbr.rel (0) target = $region9
    $region8: #{tpu_custom_call.1} parent=1 // pred_region
      %26 = dma.done [#allocation3], 256
    $region9: #{tpu_custom_call.1} parent=1 // pred_fallthru
      _
    %v27 = vld [vmem:[#allocation2] sm:$0xff]
    %v28 = vld [vmem:[#allocation2 + $0x8] sm:$0xff]
    %v29 = vadd.f32 %v27, 0.0
    %v30 = vadd.f32 %v28, 0.0
    %v31 = vsub.f32 %v29, 1.0
    %v32 = vsub.f32 %v30, 1.0
    %vm33 = vcmp.gt.f32.partialorder %v31, 0.0
    %vm34 = vcmp.gt.f32.partialorder %v32, 0.0
    %v35 = vsel %vm33, 1, 0
    %v36 = vsel %vm34, 1, 0
    %v37 = vcvt.s32.f32 %v35
    %v38 = vcvt.s32.f32 %v36
    %v39 = vsel %vm33, 0.0, %v29
    %v40 = vsel %vm34, 0.0, %v30
    %41 = vst [vmem:[#allocation5] sm:$0xff] %v37
    %42 = vst [vmem:[#allocation5 + $0x8] sm:$0xff] %v38
    %43 = vst [vmem:[#allocation6] sm:$0xff] %v39
    %44 = vst [vmem:[#allocation6 + $0x8] sm:$0xff] %v40
    %v45 = vadd.f32 %v37, %v38
    %v46 = vmul.f32 %v45, 0.1
    %v47 = vadd.f32 %v46, 0.7
    %48 = vst [vmem:[#allocation8] sm:$0xff] %v47
    // Predicated region
    $region10: #{tpu_custom_call.1} parent=1 // pred_check
      _
    $region11: #{tpu_custom_call.1} parent=1 // pred_check_branch
      %50 = sbr.rel (0) target = $region13
    $region12: #{tpu_custom_call.1} parent=1 // pred_region
      %s52 = ssub.s32 256, 256
      %53 = vsyncadd [#allocation4], %s52
      %s54 = sshll.u32 [#allocation5], 4
      %s55 = int_to_ptr.vmem [resolvable:$true] %s54
      %60 = dma.vmem_to_hbm [thread:$0]  %s55, 256, %s1, [#allocation4], 128, 128, 8
    $region13: #{tpu_custom_call.1} parent=1 // pred_fallthru
      _
    // Predicated region
    $region14: #{tpu_custom_call.1} parent=1 // pred_check
      _
    $region15: #{tpu_custom_call.1} parent=1 // pred_check_branch
      %62 = sbr.rel (0) target = $region17
    $region16: #{tpu_custom_call.1} parent=1 // pred_region
      %s64 = ssub.s32 256, 256
      %65 = vsyncadd [#allocation7], %s64
      %s66 = sshll.u32 [#allocation6], 4
      %s67 = int_to_ptr.vmem [resolvable:$true] %s66
      %72 = dma.vmem_to_hbm [thread:$0]  %s67, 256, %s2, [#allocation7], 128, 128, 8
    $region17: #{tpu_custom_call.1} parent=1 // pred_fallthru
      _
    // Predicated region
    $region18: #{tpu_custom_call.1} parent=1 // pred_check
      _
    $region19: #{tpu_custom_call.1} parent=1 // pred_check_branch
      %74 = sbr.rel (0) target = $region21
    $region20: #{tpu_custom_call.1} parent=1 // pred_region
      %s76 = ssub.s32 128, 128
      %77 = vsyncadd [#allocation7], %s76
      %s79 = sshll.u32 [#allocation8], 4
      %s80 = int_to_ptr.vmem [resolvable:$true] %s79
      %82 = dma.vmem_to_hbm [thread:$0]  %s80, 128, %s3, [#allocation7]
    $region21: #{tpu_custom_call.1} parent=1 // pred_fallthru
      _
    // Predicated region
    $region22: #{tpu_custom_call.1} parent=1 // pred_check
      _
    $region23: #{tpu_custom_call.1} parent=1 // pred_check_branch
      %84 = sbr.rel (0) target = $region25
    $region24: #{tpu_custom_call.1} parent=1 // pred_region
      %85 = dma.done [#allocation4], 256
    $region25: #{tpu_custom_call.1} parent=1 // pred_fallthru
      _
    // Predicated region
    $region26: #{tpu_custom_call.1} parent=1 // pred_check
      _
    $region27: #{tpu_custom_call.1} parent=1 // pred_check_branch
      %87 = sbr.rel (0) target = $region29
    $region28: #{tpu_custom_call.1} parent=1 // pred_region
      %88 = dma.done [#allocation7], 256
    $region29: #{tpu_custom_call.1} parent=1 // pred_fallthru
      _
    // Predicated region
    $region30: #{tpu_custom_call.1} parent=1 // pred_check
      _
    $region31: #{tpu_custom_call.1} parent=1 // pred_check_branch
      %90 = sbr.rel (0) target = $region33
    $region32: #{tpu_custom_call.1} parent=1 // pred_region
      %91 = dma.done [#allocation7], 128
    $region33: #{tpu_custom_call.1} parent=1 // pred_fallthru
      _
    %92 = vsyncpa [#allocation3], 1
    %93 = vsyncpa [#allocation4], 1
    %94 = vsyncpa [#allocation7], 1

</llo_original>
